<compile_context>
chip_gen: v7x
topology: tpu7x:2x2x1
jax: 0.10.0
libtpu: 0.0.40
codegen_flags: <defaults>
</compile_context>

<pallas_src>
import jax
import jax.numpy as jnp
from jax import lax
from jax.experimental import pallas as pl
from jax.experimental.pallas import tpu as pltpu


# ----------------------------- Pallas kernel --------------------------------

def gcn_net_kernel(x_ref, adj_ref, dinv_ref,
                   w1_ref, b1_ref, w2_ref, b2_ref,
                   w3_ref, b3_ref, w4_ref, b4_ref,
                   out_ref):
    # All refs are 2-D.  R = bt * N flattened node-rows per grid step.
    x = x_ref[...]          # (R, F)   f32
    adj = adj_ref[...]      # (R, R)   bf16, block-diagonal over the bt graphs
    dinv = dinv_ref[...]    # (R, 1)   f32

    def dense(h, w_ref, b_ref):
        # (R, Cin) @ (Cin, Cout) on the MXU, f32 accumulate, f32 bias add.
        return jnp.dot(h.astype(jnp.bfloat16), w_ref[...],
                       preferred_element_type=jnp.float32) + b_ref[...]

    def gcn(h, w_ref, b_ref):
        # relu( D^-1/2 (A+I) D^-1/2 (h @ W) + b )  without forming adj_norm:
        #   == relu( dinv * (A_hat @ ((dinv * h) @ W)) + b )
        hw = jnp.dot((h * dinv).astype(jnp.bfloat16), w_ref[...],
                     preferred_element_type=jnp.float32)            # (R, Cout)
        agg = jnp.dot(adj, hw.astype(jnp.bfloat16),
                      preferred_element_type=jnp.float32)           # (R, Cout)
        return jnp.maximum(dinv * agg + b_ref[...], 0.0)

    h = gcn(x, w1_ref, b1_ref)                       # conv1 + relu
    h = gcn(h, w2_ref, b2_ref)                       # conv2 + relu
    h = jnp.maximum(dense(h, w3_ref, b3_ref), 0.0)   # lin1 + relu
    out_ref[...] = dense(h, w4_ref, b4_ref).astype(out_ref.dtype)   # lin2


# ----------------------------- wrapper ---------------------------------------

def net_forward(x_dense, adj, params, block_graphs=None):
    """x_dense: (B, N, F) f32; adj: (B, N, N) f32 with self-loops already set."""
    B, N0, F_in = x_dense.shape
    H = params["w1"].shape[1]
    C = params["w4"].shape[1]

    # ---- pad node dim to a multiple of 16 (bf16 sublane tile alignment) ----
    N = pl.cdiv(N0, 16) * 16
    if N != N0:
        x_dense = jnp.pad(x_dense, ((0, 0), (0, N - N0), (0, 0)))
        adj = jnp.pad(adj, ((0, 0), (0, N - N0), (0, N - N0)))

    # ---- small class padding (sublane-friendly, NOT 128) -------------------
    Cp = max(8, pl.cdiv(C, 8) * 8)

    # ---- graphs per grid step ----------------------------------------------
    ROW_TARGET = 256                 # flattened rows per step (v6e/v7x MXU width)
    ADJ_TILE_BUDGET = 12 << 20       # bytes per (R,R) bf16 adj buffer
    if block_graphs is None:
        bt = max(1, min(B, pl.cdiv(ROW_TARGET, N)))
        max_rows = int((ADJ_TILE_BUDGET // 2) ** 0.5)     # adj rows fitting budget
        bt = max(1, min(bt, max(1, max_rows // N)))
        # keep >= min(4, B) grid steps: >= 2 steps per TensorCore on v7x so
        # double-buffering overlaps DMA with compute.
        min_steps = min(4, B)
        while bt > 1 and pl.cdiv(B, bt) < min_steps:
            bt = max(1, bt // 2)
    else:
        bt = block_graphs
    R = bt * N
    B_pad = pl.cdiv(B, bt) * bt
    G = B_pad // bt
    if B_pad != B:
        x_dense = jnp.pad(x_dense, ((0, B_pad - B), (0, 0), (0, 0)))
        adj = jnp.pad(adj, ((0, B_pad - B), (0, 0), (0, 0)))

    # D^-1/2 per node (deg clamped to >= 1), computed once outside the kernel.
    deg = jnp.maximum(jnp.sum(adj, axis=-1, keepdims=True), 1.0)
    dinv = lax.rsqrt(deg)                                   # (B_pad, N, 1) f32

    # ---- flatten to 2-D and pack adjacency block-diagonally per grid step --
    x_flat = x_dense.reshape(B_pad * N, F_in)
    dinv_flat = dinv.reshape(B_pad * N, 1)
    eye_bt = jnp.eye(bt, dtype=adj.dtype)
    adj_bd = jnp.einsum("gbij,bc->gbicj", adj.reshape(G, bt, N, N), eye_bt)
    adj_bd = adj_bd.reshape(B_pad * N, R).astype(jnp.bfloat16)   # 0/1 exact in bf16

    # bf16 MXU operands at the pallas_call boundary; biases stay f32.
    w1 = params["w1"].astype(jnp.bfloat16)
    w2 = params["w2"].astype(jnp.bfloat16)
    w3 = params["w3"].astype(jnp.bfloat16)
    w4 = jnp.pad(params["w4"], ((0, 0), (0, Cp - C))).astype(jnp.bfloat16)
    b4 = jnp.pad(params["b4"], ((0, 0), (0, Cp - C)))

    row_blk = lambda cols: pl.BlockSpec((R, cols), lambda g: (g, 0))
    full2d = lambda shape: pl.BlockSpec(shape, lambda g: (0, 0))

    # Explicit scoped-VMEM limit sized from the actual per-step buffers
    # (double-buffered), clamped to stay inside v7x's 64 MiB physical VMEM.
    blk_bytes = 2 * (R * F_in * 4 + R * R * 2 + R * 4 + R * Cp * 4)
    wt_bytes = 2 * ((w1.size + w2.size + w3.size + w4.size) * 2
                    + (params["b1"].size + params["b2"].size
                       + params["b3"].size + b4.size) * 4)
    vmem_limit = int(min(max(2 * (blk_bytes + wt_bytes) + (4 << 20), 32 << 20),
                         56 << 20))

    # TODO(synk): for very large N (adj tile N*N*2 bytes x 2 buffers >~ 32 MiB,
    # i.e. v7x 64 MiB VMEM) the (R,R) adj tile should be reduction-tiled over a
    # second 'arbitrary' grid axis with an f32 VMEM accumulator + pl.when.
    # TODO(synk): for large hidden dims, mark the grid-invariant weight/bias
    # BlockSpecs pipeline_mode=pl.Buffered(1) to reclaim their second buffer.
    out = pl.pallas_call(
        gcn_net_kernel,
        out_shape=jax.ShapeDtypeStruct((B_pad * N, Cp), jnp.float32),
        grid_spec=pltpu.PrefetchScalarGridSpec(
            num_scalar_prefetch=0,
            grid=(G,),
            in_specs=[
                row_blk(F_in),                       # x          (R, F)
                row_blk(R),                          # adj        (R, R) block-diag
                row_blk(1),                          # dinv       (R, 1)
                full2d((F_in, H)), full2d((1, H)),   # conv1 W, bias
                full2d((H, H)),    full2d((1, H)),   # conv2 W, bias
                full2d((H, H)),    full2d((1, H)),   # lin1  W, bias
                full2d((H, Cp)),   full2d((1, Cp)),  # lin2  W, bias (padded classes)
            ],
            out_specs=row_blk(Cp),                   # (R, Cp) f32, Cp small
        ),
        compiler_params=pltpu.CompilerParams(
            dimension_semantics=("parallel",),
            vmem_limit_bytes=vmem_limit),
    )(x_flat, adj_bd, dinv_flat,
      w1, params["b1"], w2, params["b2"],
      w3, params["b3"], w4, b4)

    return out.reshape(B_pad, N, Cp)[:B, :N0, :C]


# ------------------ plain-JAX glue: sparse -> dense conversion ---------------

def _node_pos(batch, batch_size):
    starts = jnp.searchsorted(batch, jnp.arange(batch_size))
    return jnp.arange(batch.shape[0]) - starts[batch]


def to_dense_batch(x, batch, batch_size, max_nodes):
    pos = _node_pos(batch, batch_size)
    dense = jnp.zeros((batch_size, max_nodes, x.shape[1]), x.dtype)
    dense = dense.at[batch, pos].set(x)
    mask = jnp.zeros((batch_size, max_nodes), bool).at[batch, pos].set(True)
    return dense, mask


def to_dense_adj(edge_index, batch, batch_size, max_nodes, add_self_loops=True):
    pos = _node_pos(batch, batch_size)
    src, dst = edge_index[0], edge_index[1]
    b = batch[src]
    adj = jnp.zeros((batch_size, max_nodes, max_nodes), jnp.float32)
    adj = adj.at[b, pos[src], pos[dst]].add(1.0)
    if add_self_loops:
        # DenseGCNConv (add_loop=True) sets adj[:, i, i] = 1.  Folding it here
        # (once, in the memory-bound XLA scatter) keeps it out of the kernel.
        idx = jnp.arange(max_nodes)
        adj = adj.at[:, idx, idx].set(1.0)
    return adj


# ------------------ pure-JAX f32 reference (for a sanity check) --------------

def net_reference(x_dense, adj, params):
    deg = jnp.maximum(jnp.sum(adj, axis=-1, keepdims=True), 1.0)
    dinv = lax.rsqrt(deg)
    adj_n = dinv * adj * jnp.swapaxes(dinv, -1, -2)
    h = jnp.maximum(adj_n @ (x_dense @ params["w1"]) + params["b1"], 0.0)
    h = jnp.maximum(adj_n @ (h @ params["w2"]) + params["b2"], 0.0)
    h = jnp.maximum(h @ params["w3"] + params["b3"], 0.0)
    return h @ params["w4"] + params["b4"]


# ------------------ parameter init (deterministic, synthetic) ----------------

def init_params(key, num_features, hidden_dim, num_classes):
    ks = jax.random.split(key, 8)
    s = 0.1
    return {
        "w1": s * jax.random.normal(ks[0], (num_features, hidden_dim), jnp.float32),
        "b1": s * jax.random.normal(ks[1], (1, hidden_dim), jnp.float32),
        "w2": s * jax.random.normal(ks[2], (hidden_dim, hidden_dim), jnp.float32),
        "b2": s * jax.random.normal(ks[3], (1, hidden_dim), jnp.float32),
        "w3": s * jax.random.normal(ks[4], (hidden_dim, hidden_dim), jnp.float32),
        "b3": s * jax.random.normal(ks[5], (1, hidden_dim), jnp.float32),
        "w4": s * jax.random.normal(ks[6], (hidden_dim, num_classes), jnp.float32),
        "b4": s * jax.random.normal(ks[7], (1, num_classes), jnp.float32),
    }


if __name__ == "__main__":
    # small shapes consistent with the module
    num_features, hidden_dim, num_points, num_classes = 8, 32, 16, 4
    batch_size = 8
    total_nodes = batch_size * num_points

    key = jax.random.PRNGKey(0)
    k_x, k_p = jax.random.split(key)

    # node features and batch assignment (num_points nodes per graph)
    x_nodes = jax.random.normal(k_x, (total_nodes, num_features), jnp.float32)
    batch = jnp.repeat(jnp.arange(batch_size, dtype=jnp.int32), num_points)

    # bidirectional ring edges within each graph (global node indices)
    local = jnp.arange(num_points, dtype=jnp.int32)
    srcs, dsts = [], []
    for g in range(batch_size):
        off = g * num_points
        srcs.append(off + local)
        dsts.append(off + (local + 1) % num_points)
        srcs.append(off + (local + 1) % num_points)
        dsts.append(off + local)
    edge_index = jnp.stack([jnp.concatenate(srcs), jnp.concatenate(dsts)], axis=0)

    params = init_params(k_p, num_features, hidden_dim, num_classes)

    # forward pass (mirrors Net.forward); the reference passes no mask to
    # DenseGCNConv, so the mask is computed but intentionally unused.
    adj = to_dense_adj(edge_index, batch, batch_size, num_points)            # (B, N, N)
    x_dense, _mask = to_dense_batch(x_nodes, batch, batch_size, num_points)  # (B, N, F)

    out = jax.block_until_ready(net_forward(x_dense, adj, params))           # (B, N, C)

    assert out.shape == (batch_size, num_points, num_classes)
    assert bool(jnp.all(jnp.isfinite(out)))

    # correctness vs pure-JAX f32 reference (loose tol: bf16 MXU operands)
    ref = net_reference(x_dense, adj, params)
    max_err = float(jnp.max(jnp.abs(out - ref)))
    assert max_err < 5e-2, f"max abs error vs reference: {max_err}"

    print("KERNEL_OK")
</pallas_src>

<mosaic_0001>
module attributes {stable_mosaic.version = 11 : i64} {
  func.func @gcn_net_kernel(%arg0: i32, %arg1: memref<32x8xf32, #tpu.memory_space<vmem>>, %arg2: memref<32x32xbf16, #tpu.memory_space<vmem>>, %arg3: memref<32x1xf32, #tpu.memory_space<vmem>>, %arg4: memref<8x32xbf16, #tpu.memory_space<vmem>>, %arg5: memref<1x32xf32, #tpu.memory_space<vmem>>, %arg6: memref<32x32xbf16, #tpu.memory_space<vmem>>, %arg7: memref<1x32xf32, #tpu.memory_space<vmem>>, %arg8: memref<32x32xbf16, #tpu.memory_space<vmem>>, %arg9: memref<1x32xf32, #tpu.memory_space<vmem>>, %arg10: memref<32x8xbf16, #tpu.memory_space<vmem>>, %arg11: memref<1x8xf32, #tpu.memory_space<vmem>>, %arg12: memref<32x8xf32, #tpu.memory_space<vmem>>) attributes {dimension_semantics = [#tpu.dimension_semantics<parallel>], iteration_bounds = array<i64: 4>, scalar_prefetch = 0 : i64, scratch_operands = 0 : i64, tpu.core_type = #tpu.core_type<tc>, window_params = [{transform_indices = @transform_0, window_bounds = array<i64: 32, 8>}, {transform_indices = @transform_1, window_bounds = array<i64: 32, 32>}, {transform_indices = @transform_2, window_bounds = array<i64: 32, 1>}, {pipeline_mode = #tpu.pipeline_mode<synchronous>, transform_indices = @transform_3, window_bounds = array<i64: 8, 32>}, {pipeline_mode = #tpu.pipeline_mode<synchronous>, transform_indices = @transform_4, window_bounds = array<i64: 1, 32>}, {pipeline_mode = #tpu.pipeline_mode<synchronous>, transform_indices = @transform_5, window_bounds = array<i64: 32, 32>}, {pipeline_mode = #tpu.pipeline_mode<synchronous>, transform_indices = @transform_6, window_bounds = array<i64: 1, 32>}, {pipeline_mode = #tpu.pipeline_mode<synchronous>, transform_indices = @transform_7, window_bounds = array<i64: 32, 32>}, {pipeline_mode = #tpu.pipeline_mode<synchronous>, transform_indices = @transform_8, window_bounds = array<i64: 1, 32>}, {pipeline_mode = #tpu.pipeline_mode<synchronous>, transform_indices = @transform_9, window_bounds = array<i64: 32, 8>}, {pipeline_mode = #tpu.pipeline_mode<synchronous>, transform_indices = @transform_10, window_bounds = array<i64: 1, 8>}, {transform_indices = @transform_11, window_bounds = array<i64: 32, 8>}]} {
    %c0 = arith.constant 0 : index
    %c0_0 = arith.constant 0 : index
    %0 = vector.load %arg1[%c0, %c0_0] : memref<32x8xf32, #tpu.memory_space<vmem>>, vector<32x8xf32>
    %c0_1 = arith.constant 0 : index
    %c0_2 = arith.constant 0 : index
    %1 = vector.load %arg2[%c0_1, %c0_2] : memref<32x32xbf16, #tpu.memory_space<vmem>>, vector<32x32xbf16>
    %c0_3 = arith.constant 0 : index
    %c0_4 = arith.constant 0 : index
    %2 = vector.load %arg3[%c0_3, %c0_4] : memref<32x1xf32, #tpu.memory_space<vmem>>, vector<32x1xf32>
    %3 = vector.broadcast %2 : vector<32x1xf32> to vector<32x8xf32>
    %4 = arith.mulf %0, %3 : vector<32x8xf32>
    %5 = arith.truncf %4 : vector<32x8xf32> to vector<32x8xbf16>
    %c0_5 = arith.constant 0 : index
    %c0_6 = arith.constant 0 : index
    %6 = vector.load %arg4[%c0_5, %c0_6] : memref<8x32xbf16, #tpu.memory_space<vmem>>, vector<8x32xbf16>
    %cst = arith.constant dense<0.000000e+00> : vector<32x32xf32>
    %7 = tpu.matmul %5, %6, %cst {dimension_numbers = #tpu.dot_dimension_numbers<[1], [0], [0], [1], [0, 0, 1, 1], [], []>} : vector<32x8xbf16>, vector<8x32xbf16>, vector<32x32xf32> -> vector<32x32xf32>
    %8 = arith.truncf %7 : vector<32x32xf32> to vector<32x32xbf16>
    %cst_7 = arith.constant dense<0.000000e+00> : vector<32x32xf32>
    %9 = tpu.matmul %1, %8, %cst_7 {dimension_numbers = #tpu.dot_dimension_numbers<[1], [0], [0], [1], [0, 0, 1, 1], [], []>} : vector<32x32xbf16>, vector<32x32xbf16>, vector<32x32xf32> -> vector<32x32xf32>
    %10 = vector.broadcast %2 : vector<32x1xf32> to vector<32x32xf32>
    %11 = arith.mulf %10, %9 : vector<32x32xf32>
    %c0_8 = arith.constant 0 : index
    %c0_9 = arith.constant 0 : index
    %12 = vector.load %arg5[%c0_8, %c0_9] : memref<1x32xf32, #tpu.memory_space<vmem>>, vector<1x32xf32>
    %13 = vector.broadcast %12 : vector<1x32xf32> to vector<32x32xf32>
    %14 = arith.addf %11, %13 : vector<32x32xf32>
    %cst_10 = arith.constant 0.000000e+00 : f32
    %15 = vector.broadcast %cst_10 : f32 to vector<32x32xf32>
    %16 = arith.maximumf %14, %15 : vector<32x32xf32>
    %17 = vector.broadcast %2 : vector<32x1xf32> to vector<32x32xf32>
    %18 = arith.mulf %16, %17 : vector<32x32xf32>
    %19 = arith.truncf %18 : vector<32x32xf32> to vector<32x32xbf16>
    %c0_11 = arith.constant 0 : index
    %c0_12 = arith.constant 0 : index
    %20 = vector.load %arg6[%c0_11, %c0_12] : memref<32x32xbf16, #tpu.memory_space<vmem>>, vector<32x32xbf16>
    %cst_13 = arith.constant dense<0.000000e+00> : vector<32x32xf32>
    %21 = tpu.matmul %19, %20, %cst_13 {dimension_numbers = #tpu.dot_dimension_numbers<[1], [0], [0], [1], [0, 0, 1, 1], [], []>} : vector<32x32xbf16>, vector<32x32xbf16>, vector<32x32xf32> -> vector<32x32xf32>
    %22 = arith.truncf %21 : vector<32x32xf32> to vector<32x32xbf16>
    %cst_14 = arith.constant dense<0.000000e+00> : vector<32x32xf32>
    %23 = tpu.matmul %1, %22, %cst_14 {dimension_numbers = #tpu.dot_dimension_numbers<[1], [0], [0], [1], [0, 0, 1, 1], [], []>} : vector<32x32xbf16>, vector<32x32xbf16>, vector<32x32xf32> -> vector<32x32xf32>
    %24 = vector.broadcast %2 : vector<32x1xf32> to vector<32x32xf32>
    %25 = arith.mulf %24, %23 : vector<32x32xf32>
    %c0_15 = arith.constant 0 : index
    %c0_16 = arith.constant 0 : index
    %26 = vector.load %arg7[%c0_15, %c0_16] : memref<1x32xf32, #tpu.memory_space<vmem>>, vector<1x32xf32>
    %27 = vector.broadcast %26 : vector<1x32xf32> to vector<32x32xf32>
    %28 = arith.addf %25, %27 : vector<32x32xf32>
    %cst_17 = arith.constant 0.000000e+00 : f32
    %29 = vector.broadcast %cst_17 : f32 to vector<32x32xf32>
    %30 = arith.maximumf %28, %29 : vector<32x32xf32>
    %31 = arith.truncf %30 : vector<32x32xf32> to vector<32x32xbf16>
    %c0_18 = arith.constant 0 : index
    %c0_19 = arith.constant 0 : index
    %32 = vector.load %arg8[%c0_18, %c0_19] : memref<32x32xbf16, #tpu.memory_space<vmem>>, vector<32x32xbf16>
    %cst_20 = arith.constant dense<0.000000e+00> : vector<32x32xf32>
    %33 = tpu.matmul %31, %32, %cst_20 {dimension_numbers = #tpu.dot_dimension_numbers<[1], [0], [0], [1], [0, 0, 1, 1], [], []>} : vector<32x32xbf16>, vector<32x32xbf16>, vector<32x32xf32> -> vector<32x32xf32>
    %c0_21 = arith.constant 0 : index
    %c0_22 = arith.constant 0 : index
    %34 = vector.load %arg9[%c0_21, %c0_22] : memref<1x32xf32, #tpu.memory_space<vmem>>, vector<1x32xf32>
    %35 = vector.broadcast %34 : vector<1x32xf32> to vector<32x32xf32>
    %36 = arith.addf %33, %35 : vector<32x32xf32>
    %cst_23 = arith.constant 0.000000e+00 : f32
    %37 = vector.broadcast %cst_23 : f32 to vector<32x32xf32>
    %38 = arith.maximumf %36, %37 : vector<32x32xf32>
    %39 = arith.truncf %38 : vector<32x32xf32> to vector<32x32xbf16>
    %c0_24 = arith.constant 0 : index
    %c0_25 = arith.constant 0 : index
    %40 = vector.load %arg10[%c0_24, %c0_25] : memref<32x8xbf16, #tpu.memory_space<vmem>>, vector<32x8xbf16>
    %cst_26 = arith.constant dense<0.000000e+00> : vector<32x8xf32>
    %41 = tpu.matmul %39, %40, %cst_26 {dimension_numbers = #tpu.dot_dimension_numbers<[1], [0], [0], [1], [0, 0, 1, 1], [], []>} : vector<32x32xbf16>, vector<32x8xbf16>, vector<32x8xf32> -> vector<32x8xf32>
    %c0_27 = arith.constant 0 : index
    %c0_28 = arith.constant 0 : index
    %42 = vector.load %arg11[%c0_27, %c0_28] : memref<1x8xf32, #tpu.memory_space<vmem>>, vector<1x8xf32>
    %43 = vector.broadcast %42 : vector<1x8xf32> to vector<32x8xf32>
    %44 = arith.addf %41, %43 : vector<32x8xf32>
    %c0_29 = arith.constant 0 : index
    %c0_30 = arith.constant 0 : index
    %45 = vector.load %arg12[%c0_29, %c0_30] : memref<32x8xf32, #tpu.memory_space<vmem>>, vector<32x8xf32>
    tpu.vector_store %arg12[%c0_29, %c0_30], %44 {strides = array<i32>} : memref<32x8xf32, #tpu.memory_space<vmem>>, vector<32x8xf32>,
    return
  }
  func.func @transform_0(%arg0: i32) -> (i32, i32) {
    %c0_i32 = arith.constant 0 : i32
    %c0_i32_0 = arith.constant 0 : i32
    return %arg0, %c0_i32 : i32, i32
  }
  func.func @transform_1(%arg0: i32) -> (i32, i32) {
    %c0_i32 = arith.constant 0 : i32
    %c0_i32_0 = arith.constant 0 : i32
    return %arg0, %c0_i32 : i32, i32
  }
  func.func @transform_2(%arg0: i32) -> (i32, i32) {
    %c0_i32 = arith.constant 0 : i32
    %c0_i32_0 = arith.constant 0 : i32
    return %arg0, %c0_i32 : i32, i32
  }
  func.func @transform_3(%arg0: i32) -> (i32, i32) {
    %c0_i32 = arith.constant 0 : i32
    %c0_i32_0 = arith.constant 0 : i32
    %c0_i32_1 = arith.constant 0 : i32
    return %c0_i32, %c0_i32_0 : i32, i32
  }
  func.func @transform_4(%arg0: i32) -> (i32, i32) {
    %c0_i32 = arith.constant 0 : i32
    %c0_i32_0 = arith.constant 0 : i32
    %c0_i32_1 = arith.constant 0 : i32
    return %c0_i32, %c0_i32_0 : i32, i32
  }
  func.func @transform_5(%arg0: i32) -> (i32, i32) {
    %c0_i32 = arith.constant 0 : i32
    %c0_i32_0 = arith.constant 0 : i32
    %c0_i32_1 = arith.constant 0 : i32
    return %c0_i32, %c0_i32_0 : i32, i32
  }
  func.func @transform_6(%arg0: i32) -> (i32, i32) {
    %c0_i32 = arith.constant 0 : i32
    %c0_i32_0 = arith.constant 0 : i32
    %c0_i32_1 = arith.constant 0 : i32
    return %c0_i32, %c0_i32_0 : i32, i32
  }
  func.func @transform_7(%arg0: i32) -> (i32, i32) {
    %c0_i32 = arith.constant 0 : i32
    %c0_i32_0 = arith.constant 0 : i32
    %c0_i32_1 = arith.constant 0 : i32
    return %c0_i32, %c0_i32_0 : i32, i32
  }
  func.func @transform_8(%arg0: i32) -> (i32, i32) {
    %c0_i32 = arith.constant 0 : i32
    %c0_i32_0 = arith.constant 0 : i32
    %c0_i32_1 = arith.constant 0 : i32
    return %c0_i32, %c0_i32_0 : i32, i32
  }
  func.func @transform_9(%arg0: i32) -> (i32, i32) {
    %c0_i32 = arith.constant 0 : i32
    %c0_i32_0 = arith.constant 0 : i32
    %c0_i32_1 = arith.constant 0 : i32
    return %c0_i32, %c0_i32_0 : i32, i32
  }
  func.func @transform_10(%arg0: i32) -> (i32, i32) {
    %c0_i32 = arith.constant 0 : i32
    %c0_i32_0 = arith.constant 0 : i32
    %c0_i32_1 = arith.constant 0 : i32
    return %c0_i32, %c0_i32_0 : i32, i32
  }
  func.func @transform_11(%arg0: i32) -> (i32, i32) {
    %c0_i32 = arith.constant 0 : i32
    %c0_i32_0 = arith.constant 0 : i32
    return %arg0, %c0_i32 : i32, i32
  }
}

</mosaic_0001>

<llo_original>
// kernel: tpu_custom_call.1
$region0: #{tpu_custom_call.1}
  #allocation0 [shape = 'u32[]', space=smem, size = 0x4, offset = 0x4, fixed_abs, tag = 'smem constant byte address 0x4 - core index']
  #allocation1 [shape = 'u32[144,128]{1,0:T(1,128)}', space=vmem, size = 0x12000, scoped, tag = 'internal scratch']
  %s0 = inlined_call_operand.vmem [shape: f32[128,8], index: 0, kind: input, shape index: {}]
  %s1 = inlined_call_operand.vmem [shape: bf16[128,32], index: 1, kind: input, shape index: {}]
  %s2 = inlined_call_operand.vmem [shape: f32[128,1], index: 2, kind: input, shape index: {}]
  %s3 = inlined_call_operand.vmem [shape: bf16[8,32], index: 3, kind: input, shape index: {}]
  %s4 = inlined_call_operand.vmem [shape: f32[1,32], index: 4, kind: input, shape index: {}]
  %s5 = inlined_call_operand.vmem [shape: bf16[32,32], index: 5, kind: input, shape index: {}]
  %s6 = inlined_call_operand.vmem [shape: f32[1,32], index: 6, kind: input, shape index: {}]
  %s7 = inlined_call_operand.vmem [shape: bf16[32,32], index: 7, kind: input, shape index: {}]
  %s8 = inlined_call_operand.vmem [shape: f32[1,32], index: 8, kind: input, shape index: {}]
  %s9 = inlined_call_operand.vmem [shape: bf16[32,8], index: 9, kind: input, shape index: {}]
  %s10 = inlined_call_operand.vmem [shape: f32[1,8], index: 10, kind: input, shape index: {}]
  %s11 = inlined_call_operand.vmem [shape: f32[128,8], index: 11, kind: output, shape index: {}]
  %s12 = sld [smem:[#allocation0]]
  $region77: #{tpu_custom_call.1} parent=0
    _
  %s14 = ssub.s32 1, %s12
  %s15 = scalar_select 0, %s14, %s12
  loop: start=0, step=1, limit=6
  $region2: #{tpu_custom_call.1} parent=0 // loop_pre_header
    _
  $region3: #{tpu_custom_call.1} parent=0 // loop_header
    %s17 = sphi 0, %s21
    %p18 = scmp.ge.s32.totalorder %s17, 6
    %s27 = sphi 0, %s29
    %s30 = sphi 0, %s27
    %s31 = sphi 0, %s30
    %s47 = sphi 0, %s31
    %s53 = sphi 0, %s55
    %s56 = sphi 0, %s53
    %s57 = sphi 0, %s56
    %s73 = sphi 0, %s57
    %s79 = sphi 0, %s81
    %s82 = sphi 0, %s79
    %s83 = sphi 0, %s82
    %s99 = sphi 0, %s83
    %s103 = sphi 0, %s103
    %s105 = sphi 0, %s103
    %s106 = sphi 0, %s105
    %s120 = sphi 0, %s106
    %s124 = sphi 0, %s124
    %s126 = sphi 0, %s124
    %s127 = sphi 0, %s126
    %s141 = sphi 0, %s127
    %s145 = sphi 0, %s145
    %s147 = sphi 0, %s145
    %s148 = sphi 0, %s147
    %s162 = sphi 0, %s148
    %s166 = sphi 0, %s166
    %s168 = sphi 0, %s166
    %s169 = sphi 0, %s168
    %s183 = sphi 0, %s169
    %s187 = sphi 0, %s187
    %s189 = sphi 0, %s187
    %s190 = sphi 0, %s189
    %s204 = sphi 0, %s190
    %s208 = sphi 0, %s208
    %s210 = sphi 0, %s208
    %s211 = sphi 0, %s210
    %s225 = sphi 0, %s211
    %s229 = sphi 0, %s229
    %s231 = sphi 0, %s229
    %s232 = sphi 0, %s231
    %s246 = sphi 0, %s232
    %s250 = sphi 0, %s250
    %s252 = sphi 0, %s250
    %s253 = sphi 0, %s252
    %s267 = sphi 0, %s253
    %s273 = sphi 0, %s275
    %s276 = sphi 0, %s273
    %s277 = sphi 0, %s276
    %s293 = sphi 0, %s277
  $region4: #{tpu_custom_call.1} parent=0 // loop_header_branch
    %20 = sbr.rel (%p18) target = $region8
  $region5: #{tpu_custom_call.1} parent=0 // loop_body
    %s22 = ssub.s32 %s17, 1
    %s23 = ssub.s32 %s17, 2
    %s24 = sadd.s32 %s17, 1
    %s25 = ssub.s32 %s17, %s24
    %p26 = scmp.eq.s32.totalorder %s25, 0
    %s28 = sadd.s32 %s27, 1
    %s29 = scalar_select %p26, %s27, %s28
    %p32 = pneg %p26
    %p33 = scmp.eq.s32.totalorder %s17, 3
    %p34 = por %p32, %p33
    %p35 = scmp.ne.s32.totalorder %s27, %s30
    %p36 = scmp.eq.s32.totalorder %s17, 0
    %p37 = por %p35, %p36
    %p38 = scmp.ne.s32.totalorder %s27, %s30
    %p39 = scmp.eq.s32.totalorder %s22, 3
    %p40 = por %p38, %p39
    %p41 = scmp.ne.s32.totalorder %s30, %s31
    %p42 = scmp.eq.s32.totalorder %s22, 0
    %p43 = por %p41, %p42
    %p44 = scmp.ne.s32.totalorder %s30, %s31
    %p45 = scmp.eq.s32.totalorder %s23, 3
    %p46 = por %p44, %p45
    %p48 = scmp.ne.s32.totalorder %s31, %s47
    %p49 = scmp.eq.s32.totalorder %s23, 0
    %p50 = por %p48, %p49
    %s51 = ssub.s32 %s17, %s24
    %p52 = scmp.eq.s32.totalorder %s51, 0
    %s54 = sadd.s32 %s53, 1
    %s55 = scalar_select %p52, %s53, %s54
    %p58 = pneg %p52
    %p59 = scmp.eq.s32.totalorder %s17, 3
    %p60 = por %p58, %p59
    %p61 = scmp.ne.s32.totalorder %s53, %s56
    %p62 = scmp.eq.s32.totalorder %s17, 0
    %p63 = por %p61, %p62
    %p64 = scmp.ne.s32.totalorder %s53, %s56
    %p65 = scmp.eq.s32.totalorder %s22, 3
    %p66 = por %p64, %p65
    %p67 = scmp.ne.s32.totalorder %s56, %s57
    %p68 = scmp.eq.s32.totalorder %s22, 0
    %p69 = por %p67, %p68
    %p70 = scmp.ne.s32.totalorder %s56, %s57
    %p71 = scmp.eq.s32.totalorder %s23, 3
    %p72 = por %p70, %p71
    %p74 = scmp.ne.s32.totalorder %s57, %s73
    %p75 = scmp.eq.s32.totalorder %s23, 0
    %p76 = por %p74, %p75
    %s77 = ssub.s32 %s17, %s24
    %p78 = scmp.eq.s32.totalorder %s77, 0
    %s80 = sadd.s32 %s79, 1
    %s81 = scalar_select %p78, %s79, %s80
    %p84 = pneg %p78
    %p85 = scmp.eq.s32.totalorder %s17, 3
    %p86 = por %p84, %p85
    %p87 = scmp.ne.s32.totalorder %s79, %s82
    %p88 = scmp.eq.s32.totalorder %s17, 0
    %p89 = por %p87, %p88
    %p90 = scmp.ne.s32.totalorder %s79, %s82
    %p91 = scmp.eq.s32.totalorder %s22, 3
    %p92 = por %p90, %p91
    %p93 = scmp.ne.s32.totalorder %s82, %s83
    %p94 = scmp.eq.s32.totalorder %s22, 0
    %p95 = por %p93, %p94
    %p96 = scmp.ne.s32.totalorder %s82, %s83
    %p97 = scmp.eq.s32.totalorder %s23, 3
    %p98 = por %p96, %p97
    %p100 = scmp.ne.s32.totalorder %s83, %s99
    %p101 = scmp.eq.s32.totalorder %s23, 0
    %p102 = por %p100, %p101
    %s104 = sadd.s32 %s103, 1
    %p107 = scmp.eq.s32.totalorder %s17, 3
    %p108 = scmp.ne.s32.totalorder %s103, %s105
    %p109 = scmp.eq.s32.totalorder %s17, 0
    %p110 = por %p108, %p109
    %p111 = scmp.ne.s32.totalorder %s103, %s105
    %p112 = scmp.eq.s32.totalorder %s22, 3
    %p113 = por %p111, %p112
    %p114 = scmp.ne.s32.totalorder %s105, %s106
    %p115 = scmp.eq.s32.totalorder %s22, 0
    %p116 = por %p114, %p115
    %p117 = scmp.ne.s32.totalorder %s105, %s106
    %p118 = scmp.eq.s32.totalorder %s23, 3
    %p119 = por %p117, %p118
    %p121 = scmp.ne.s32.totalorder %s106, %s120
    %p122 = scmp.eq.s32.totalorder %s23, 0
    %p123 = por %p121, %p122
    %s125 = sadd.s32 %s124, 1
    %p128 = scmp.eq.s32.totalorder %s17, 3
    %p129 = scmp.ne.s32.totalorder %s124, %s126
    %p130 = scmp.eq.s32.totalorder %s17, 0
    %p131 = por %p129, %p130
    %p132 = scmp.ne.s32.totalorder %s124, %s126
    %p133 = scmp.eq.s32.totalorder %s22, 3
    %p134 = por %p132, %p133
    %p135 = scmp.ne.s32.totalorder %s126, %s127
    %p136 = scmp.eq.s32.totalorder %s22, 0
    %p137 = por %p135, %p136
    %p138 = scmp.ne.s32.totalorder %s126, %s127
    %p139 = scmp.eq.s32.totalorder %s23, 3
    %p140 = por %p138, %p139
    %p142 = scmp.ne.s32.totalorder %s127, %s141
    %p143 = scmp.eq.s32.totalorder %s23, 0
    %p144 = por %p142, %p143
    %s146 = sadd.s32 %s145, 1
    %p149 = scmp.eq.s32.totalorder %s17, 3
    %p150 = scmp.ne.s32.totalorder %s145, %s147
    %p151 = scmp.eq.s32.totalorder %s17, 0
    %p152 = por %p150, %p151
    %p153 = scmp.ne.s32.totalorder %s145, %s147
    %p154 = scmp.eq.s32.totalorder %s22, 3
    %p155 = por %p153, %p154
    %p156 = scmp.ne.s32.totalorder %s147, %s148
    %p157 = scmp.eq.s32.totalorder %s22, 0
    %p158 = por %p156, %p157
    %p159 = scmp.ne.s32.totalorder %s147, %s148
    %p160 = scmp.eq.s32.totalorder %s23, 3
    %p161 = por %p159, %p160
    %p163 = scmp.ne.s32.totalorder %s148, %s162
    %p164 = scmp.eq.s32.totalorder %s23, 0
    %p165 = por %p163, %p164
    %s167 = sadd.s32 %s166, 1
    %p170 = scmp.eq.s32.totalorder %s17, 3
    %p171 = scmp.ne.s32.totalorder %s166, %s168
    %p172 = scmp.eq.s32.totalorder %s17, 0
    %p173 = por %p171, %p172
    %p174 = scmp.ne.s32.totalorder %s166, %s168
    %p175 = scmp.eq.s32.totalorder %s22, 3
    %p176 = por %p174, %p175
    %p177 = scmp.ne.s32.totalorder %s168, %s169
    %p178 = scmp.eq.s32.totalorder %s22, 0
    %p179 = por %p177, %p178
    %p180 = scmp.ne.s32.totalorder %s168, %s169
    %p181 = scmp.eq.s32.totalorder %s23, 3
    %p182 = por %p180, %p181
    %p184 = scmp.ne.s32.totalorder %s169, %s183
    %p185 = scmp.eq.s32.totalorder %s23, 0
    %p186 = por %p184, %p185
    %s188 = sadd.s32 %s187, 1
    %p191 = scmp.eq.s32.totalorder %s17, 3
    %p192 = scmp.ne.s32.totalorder %s187, %s189
    %p193 = scmp.eq.s32.totalorder %s17, 0
    %p194 = por %p192, %p193
    %p195 = scmp.ne.s32.totalorder %s187, %s189
    %p196 = scmp.eq.s32.totalorder %s22, 3
    %p197 = por %p195, %p196
    %p198 = scmp.ne.s32.totalorder %s189, %s190
    %p199 = scmp.eq.s32.totalorder %s22, 0
    %p200 = por %p198, %p199
    %p201 = scmp.ne.s32.totalorder %s189, %s190
    %p202 = scmp.eq.s32.totalorder %s23, 3
    %p203 = por %p201, %p202
    %p205 = scmp.ne.s32.totalorder %s190, %s204
    %p206 = scmp.eq.s32.totalorder %s23, 0
    %p207 = por %p205, %p206
    %s209 = sadd.s32 %s208, 1
    %p212 = scmp.eq.s32.totalorder %s17, 3
    %p213 = scmp.ne.s32.totalorder %s208, %s210
    %p214 = scmp.eq.s32.totalorder %s17, 0
    %p215 = por %p213, %p214
    %p216 = scmp.ne.s32.totalorder %s208, %s210
    %p217 = scmp.eq.s32.totalorder %s22, 3
    %p218 = por %p216, %p217
    %p219 = scmp.ne.s32.totalorder %s210, %s211
    %p220 = scmp.eq.s32.totalorder %s22, 0
    %p221 = por %p219, %p220
    %p222 = scmp.ne.s32.totalorder %s210, %s211
    %p223 = scmp.eq.s32.totalorder %s23, 3
    %p224 = por %p222, %p223
    %p226 = scmp.ne.s32.totalorder %s211, %s225
    %p227 = scmp.eq.s32.totalorder %s23, 0
    %p228 = por %p226, %p227
    %s230 = sadd.s32 %s229, 1
    %p233 = scmp.eq.s32.totalorder %s17, 3
    %p234 = scmp.ne.s32.totalorder %s229, %s231
    %p235 = scmp.eq.s32.totalorder %s17, 0
    %p236 = por %p234, %p235
    %p237 = scmp.ne.s32.totalorder %s229, %s231
    %p238 = scmp.eq.s32.totalorder %s22, 3
    %p239 = por %p237, %p238
    %p240 = scmp.ne.s32.totalorder %s231, %s232
    %p241 = scmp.eq.s32.totalorder %s22, 0
    %p242 = por %p240, %p241
    %p243 = scmp.ne.s32.totalorder %s231, %s232
    %p244 = scmp.eq.s32.totalorder %s23, 3
    %p245 = por %p243, %p244
    %p247 = scmp.ne.s32.totalorder %s232, %s246
    %p248 = scmp.eq.s32.totalorder %s23, 0
    %p249 = por %p247, %p248
    %s251 = sadd.s32 %s250, 1
    %p254 = scmp.eq.s32.totalorder %s17, 3
    %p255 = scmp.ne.s32.totalorder %s250, %s252
    %p256 = scmp.eq.s32.totalorder %s17, 0
    %p257 = por %p255, %p256
    %p258 = scmp.ne.s32.totalorder %s250, %s252
    %p259 = scmp.eq.s32.totalorder %s22, 3
    %p260 = por %p258, %p259
    %p261 = scmp.ne.s32.totalorder %s252, %s253
    %p262 = scmp.eq.s32.totalorder %s22, 0
    %p263 = por %p261, %p262
    %p264 = scmp.ne.s32.totalorder %s252, %s253
    %p265 = scmp.eq.s32.totalorder %s23, 3
    %p266 = por %p264, %p265
    %p268 = scmp.ne.s32.totalorder %s253, %s267
    %p269 = scmp.eq.s32.totalorder %s23, 0
    %p270 = por %p268, %p269
    %s271 = ssub.s32 %s17, %s24
    %p272 = scmp.eq.s32.totalorder %s271, 0
    %s274 = sadd.s32 %s273, 1
    %s275 = scalar_select %p272, %s273, %s274
    %p278 = pneg %p272
    %p279 = scmp.eq.s32.totalorder %s17, 3
    %p280 = por %p278, %p279
    %p281 = scmp.ne.s32.totalorder %s273, %s276
    %p282 = scmp.eq.s32.totalorder %s17, 0
    %p283 = por %p281, %p282
    %p284 = scmp.ne.s32.totalorder %s273, %s276
    %p285 = scmp.eq.s32.totalorder %s22, 3
    %p286 = por %p284, %p285
    %p287 = scmp.ne.s32.totalorder %s276, %s277
    %p288 = scmp.eq.s32.totalorder %s22, 0
    %p289 = por %p287, %p288
    %p290 = scmp.ne.s32.totalorder %s276, %s277
    %p291 = scmp.eq.s32.totalorder %s23, 3
    %p292 = por %p290, %p291
    %p294 = scmp.ne.s32.totalorder %s277, %s293
    %p295 = scmp.eq.s32.totalorder %s23, 0
    %p296 = por %p294, %p295
    %p297 = scmp.le.s32.totalorder 1, %s17
    %p298 = scmp.lt.s32.totalorder %s17, 5
    %p299 = pnand %p297, %p298
    %p300 = pneg %p299
    // Predicated region
    $region9: #{tpu_custom_call.1} parent=5 // pred_check
      _
    $region10: #{tpu_custom_call.1} parent=5 // pred_check_branch
      %302 = sbr.rel (%p299) target = $region12
    $region11: #{tpu_custom_call.1} parent=5 // pred_region
      %s303 = ssub.s32 %s17, 1
      // Predicated region
      $region13: #{tpu_custom_call.1} parent=11 // pred_check
        %p304 = pneg %p116
      $region14: #{tpu_custom_call.1} parent=11 // pred_check_branch
        %306 = sbr.rel (%p304) target = $region16
      $region15: #{tpu_custom_call.1} parent=11 // pred_region
        _
      $region16: #{tpu_custom_call.1} parent=11 // pred_fallthru
        _
      // Predicated region
      $region17: #{tpu_custom_call.1} parent=11 // pred_check
        %p307 = pneg %p137
      $region18: #{tpu_custom_call.1} parent=11 // pred_check_branch
        %309 = sbr.rel (%p307) target = $region20
      $region19: #{tpu_custom_call.1} parent=11 // pred_region
        _
      $region20: #{tpu_custom_call.1} parent=11 // pred_fallthru
        _
      // Predicated region
      $region21: #{tpu_custom_call.1} parent=11 // pred_check
        %p310 = pneg %p158
      $region22: #{tpu_custom_call.1} parent=11 // pred_check_branch
        %312 = sbr.rel (%p310) target = $region24
      $region23: #{tpu_custom_call.1} parent=11 // pred_region
        _
      $region24: #{tpu_custom_call.1} parent=11 // pred_fallthru
        _
      // Predicated region
      $region25: #{tpu_custom_call.1} parent=11 // pred_check
        %p313 = pneg %p179
      $region26: #{tpu_custom_call.1} parent=11 // pred_check_branch
        %315 = sbr.rel (%p313) target = $region28
      $region27: #{tpu_custom_call.1} parent=11 // pred_region
        _
      $region28: #{tpu_custom_call.1} parent=11 // pred_fallthru
        _
      // Predicated region
      $region29: #{tpu_custom_call.1} parent=11 // pred_check
        %p316 = pneg %p200
      $region30: #{tpu_custom_call.1} parent=11 // pred_check_branch
        %318 = sbr.rel (%p316) target = $region32
      $region31: #{tpu_custom_call.1} parent=11 // pred_region
        _
      $region32: #{tpu_custom_call.1} parent=11 // pred_fallthru
        _
      // Predicated region
      $region33: #{tpu_custom_call.1} parent=11 // pred_check
        %p319 = pneg %p221
      $region34: #{tpu_custom_call.1} parent=11 // pred_check_branch
        %321 = sbr.rel (%p319) target = $region36
      $region35: #{tpu_custom_call.1} parent=11 // pred_region
        _
      $region36: #{tpu_custom_call.1} parent=11 // pred_fallthru
        _
      // Predicated region
      $region37: #{tpu_custom_call.1} parent=11 // pred_check
        %p322 = pneg %p242
      $region38: #{tpu_custom_call.1} parent=11 // pred_check_branch
        %324 = sbr.rel (%p322) target = $region40
      $region39: #{tpu_custom_call.1} parent=11 // pred_region
        _
      $region40: #{tpu_custom_call.1} parent=11 // pred_fallthru
        _
      // Predicated region
      $region41: #{tpu_custom_call.1} parent=11 // pred_check
        %p325 = pneg %p263
      $region42: #{tpu_custom_call.1} parent=11 // pred_check_branch
        %327 = sbr.rel (%p325) target = $region44
      $region43: #{tpu_custom_call.1} parent=11 // pred_region
        _
      $region44: #{tpu_custom_call.1} parent=11 // pred_fallthru
        _
    $region12: #{tpu_custom_call.1} parent=5 // pred_fallthru
      _
    %p328 = scmp.lt.s32.totalorder %s17, 4
    // Predicated region
    $region45: #{tpu_custom_call.1} parent=5 // pred_check
      %p329 = pneg %p328
    $region46: #{tpu_custom_call.1} parent=5 // pred_check_branch
      %331 = sbr.rel (%p329) target = $region48
    $region47: #{tpu_custom_call.1} parent=5 // pred_region
      // Predicated region
      $region49: #{tpu_custom_call.1} parent=47 // pred_check
        %p332 = pneg %p37
      $region50: #{tpu_custom_call.1} parent=47 // pred_check_branch
        %334 = sbr.rel (%p332) target = $region52
      $region51: #{tpu_custom_call.1} parent=47 // pred_region
        %s335 = smul.u32 4, %s17
        %p336 = scmp.lt.s32.totalorder %s335, 15
        %s337 = scalar_select %p336, %s335, 15
        %s338 = smul.addr %s337, 8
        %s339 = scalar_lea.vmem %s0, %s338
        %s340 = smul.u32 4, %s17
      $region52: #{tpu_custom_call.1} parent=47 // pred_fallthru
        _
      // Predicated region
      $region53: #{tpu_custom_call.1} parent=47 // pred_check
        %p341 = pneg %p63
      $region54: #{tpu_custom_call.1} parent=47 // pred_check_branch
        %343 = sbr.rel (%p341) target = $region56
      $region55: #{tpu_custom_call.1} parent=47 // pred_region
        %s344 = smul.u32 4, %s17
        %p345 = scmp.lt.s32.totalorder %s344, 15
        %s346 = scalar_select %p345, %s344, 15
        %s347 = smul.addr %s346, 4
        %s348 = scalar_lea.vmem %s1, %s347
        %s349 = smul.u32 4, %s17
      $region56: #{tpu_custom_call.1} parent=47 // pred_fallthru
        _
      // Predicated region
      $region57: #{tpu_custom_call.1} parent=47 // pred_check
        %p350 = pneg %p89
      $region58: #{tpu_custom_call.1} parent=47 // pred_check_branch
        %352 = sbr.rel (%p350) target = $region60
      $region59: #{tpu_custom_call.1} parent=47 // pred_region
        %s353 = smul.u32 4, %s17
        %p354 = scmp.lt.s32.totalorder %s353, 15
        %s355 = scalar_select %p354, %s353, 15
        %s356 = smul.addr %s355, 8
        %s357 = scalar_lea.vmem %s2, %s356
        %s358 = smul.u32 4, %s17
      $region60: #{tpu_custom_call.1} parent=47 // pred_fallthru
        _
    $region48: #{tpu_custom_call.1} parent=5 // pred_fallthru
      _
    %p359 = scmp.le.s32.totalorder 1, %s17
    %p360 = scmp.lt.s32.totalorder %s17, 5
    %p361 = pnand %p359, %p360
    %p362 = pneg %p361
    // Predicated region
    $region61: #{tpu_custom_call.1} parent=5 // pred_check
      _
    $region62: #{tpu_custom_call.1} parent=5 // pred_check_branch
      %364 = sbr.rel (%p361) target = $region64
    $region63: #{tpu_custom_call.1} parent=5 // pred_region
      %s365 = ssub.s32 %s17, 1
      %s366 = smul.u32 4, %s22
      %p367 = scmp.lt.s32.totalorder %s366, 15
      %s368 = scalar_select %p367, %s366, 15
      %s369 = smul.addr %s368, 8
      %s370 = scalar_lea.vmem %s0, %s369
      %p371 = pneg %p43
      %p372 = pneg %p40
      %s373 = smul.u32 4, %s22
      %p374 = scmp.lt.s32.totalorder %s373, 15
      %s375 = scalar_select %p374, %s373, 15
      %s376 = smul.addr %s375, 4
      %s377 = scalar_lea.vmem %s1, %s376
      %p378 = pneg %p69
      %p379 = pneg %p66
      %s380 = smul.u32 4, %s22
      %p381 = scmp.lt.s32.totalorder %s380, 15
      %s382 = scalar_select %p381, %s380, 15
      %s383 = smul.addr %s382, 8
      %s384 = scalar_lea.vmem %s2, %s383
      %p385 = pneg %p95
      %p386 = pneg %p92
      %p387 = pneg %p116
      %p388 = pneg %p113
      %p389 = pneg %p137
      %p390 = pneg %p134
      %p391 = pneg %p158
      %p392 = pneg %p155
      %p393 = pneg %p179
      %p394 = pneg %p176
      %p395 = pneg %p200
      %p396 = pneg %p197
      %p397 = pneg %p221
      %p398 = pneg %p218
      %p399 = pneg %p242
      %p400 = pneg %p239
      %p401 = pneg %p263
      %p402 = pneg %p260
      %p403 = pneg %p289
      %p404 = pneg %p286
      %s405 = smul.u32 4, %s22
      %p406 = scmp.lt.s32.totalorder %s405, 15
      %s407 = scalar_select %p406, %s405, 15
      %s408 = smul.addr %s407, 8
      %s409 = scalar_lea.vmem %s11, %s408
      %s410 = smul.u32 4, %s22
      %p411 = scmp.lt.s32.totalorder %s410, 15
      %s412 = scalar_select %p411, %s410, 15
      %s413 = smul.addr %s412, 8
      %s414 = scalar_lea.vmem %s0, %s413
      %s415 = smul.u32 4, %s22
      %s416 = smul.u32 4, %s22
      %p417 = scmp.lt.s32.totalorder %s416, 15
      %s418 = scalar_select %p417, %s416, 15
      %s419 = smul.addr %s418, 4
      %s420 = scalar_lea.vmem %s1, %s419
      %s421 = smul.u32 4, %s22
      %s422 = smul.u32 4, %s22
      %p423 = scmp.lt.s32.totalorder %s422, 15
      %s424 = scalar_select %p423, %s422, 15
      %s425 = smul.addr %s424, 8
      %s426 = scalar_lea.vmem %s2, %s425
      %s427 = smul.u32 4, %s22
      %s428 = smul.u32 4, %s22
      %p429 = scmp.lt.s32.totalorder %s428, 15
      %s430 = scalar_select %p429, %s428, 15
      %s431 = smul.addr %s430, 8
      %s432 = scalar_lea.vmem %s11, %s431
      %s433 = smul.u32 4, %s22
      %v435 = vld [vmem:[%s414] sm:$0xff]
      %v436 = vld [vmem:[%s414 + $0x8] sm:$0xff]
      %v437 = vld [vmem:[%s414 + $0x10] sm:$0xff]
      %v438 = vld [vmem:[%s414 + $0x18] sm:$0xff]
      %v439 = vld [vmem:[%s420] sm:$0xf]
      %v440 = vld [vmem:[%s420 + $0x4] sm:$0xf]
      %v441 = vld [vmem:[%s420 + $0x8] sm:$0xf]
      %v442 = vld [vmem:[%s420 + $0xc] sm:$0xf]
      %v443 = vld [vmem:[%s426] sm:$0xff]
      %v444 = vld [vmem:[%s426 + $0x8] sm:$0xff]
      %v445 = vld [vmem:[%s426 + $0x10] sm:$0xff]
      %v446 = vld [vmem:[%s426 + $0x18] sm:$0xff]
      %448 = vset.pattern.permute.xlu0 0
      %449 = vperm.xlu0 %448, %v443
      %v450 = vpop.permute.xlu0 %449
      %453 = vset.pattern.permute.xlu0 0
      %454 = vperm.xlu0 %453, %v444
      %v455 = vpop.permute.xlu0 %454
      %458 = vset.pattern.permute.xlu0 0
      %459 = vperm.xlu0 %458, %v445
      %v460 = vpop.permute.xlu0 %459
      %463 = vset.pattern.permute.xlu0 0
      %464 = vperm.xlu0 %463, %v446
      %v465 = vpop.permute.xlu0 %464
      %v467 = vmul.f32 %v435, %v450
      %v468 = vmul.f32 %v436, %v455
      %v469 = vmul.f32 %v437, %v460
      %v470 = vmul.f32 %v438, %v465
      %v471 = vpack.c.bf16 %v468, %v467
      %v472 = vpack.c.bf16 %v470, %v469
      %v473 = vld [vmem:[%s3] sm:$0xf]
      %vm474 = vcmask 64512
      %v476 = vsel %vm474, %v471, 0
      %v479 = vsel %vm474, %v472, 0
      %vm481 = vcmask 1043456
      %v483 = vsel %vm481, %v473, 0
      %485 = vmatprep.subr.bf16.mxu0 0
      %486 = vmatpush1.bf16.msra.mxu0 %v483
      %487 = vmatprep.subr.bf16.mxu0 0
      %488 = vmatpush1.bf16.msra.mxu0 0
      %489 = vmatprep.subr.bf16.mxu0 0
      %490 = vmatpush1.bf16.msra.mxu0 0
      %491 = vmatprep.subr.bf16.mxu0 0
      %492 = vmatpush1.bf16.msra.mxu0 0
      %493 = vmatprep.subr.bf16.mxu0 0
      %494 = vmatpush1.bf16.msra.mxu0 0
      %495 = vmatprep.subr.bf16.mxu0 0
      %496 = vmatpush1.bf16.msra.mxu0 0
      %497 = vmatprep.subr.bf16.mxu0 0
      %498 = vmatpush1.bf16.msra.mxu0 0
      %499 = vmatprep.subr.bf16.mxu0 0
      %500 = vmatpush1.bf16.msra.mxu0 0
      %501 = vmatprep.subr.bf16.mxu0 0
      %502 = vmatpush1.bf16.msra.mxu0 0
      %503 = vmatprep.subr.bf16.mxu0 0
      %504 = vmatpush1.bf16.msra.mxu0 0
      %505 = vmatprep.subr.bf16.mxu0 0
      %506 = vmatpush1.bf16.msra.mxu0 0
      %507 = vmatprep.subr.bf16.mxu0 0
      %508 = vmatpush1.bf16.msra.mxu0 0
      %509 = vmatprep.subr.bf16.mxu0 0
      %510 = vmatpush1.bf16.msra.mxu0 0
      %511 = vmatprep.subr.bf16.mxu0 0
      %512 = vmatpush1.bf16.msra.mxu0 0
      %513 = vmatprep.subr.bf16.mxu0 0
      %514 = vmatpush1.bf16.msra.mxu0 0
      %515 = vmatprep.subr.bf16.mxu0 0
      %516 = vmatpush1.bf16.msra.mxu0 0
      %517 = vmatprep.mubr.bf16.mxu0 0
      %518 = vmatmul.mubr.bf16.gmra.mrb[0].mxu0 %v476
      %v519 = vpop.f32.mrb[0].mxu0
      %v520 = vadd.f32 0.0, %v519
      %v521 = vpop.f32.mrb[0].mxu0
      %v522 = vpop.f32.mrb[0].mxu0
      %v523 = vadd.f32 0.0, %v522
      %v524 = vpop.f32.mrb[0].mxu0
      %525 = vmatprep.mubr.bf16.mxu0 0
      %526 = vmatmul.mubr.bf16.gmra.mrb[0].mxu0 %v479
      %v527 = vpop.f32.mrb[0].mxu0
      %v528 = vadd.f32 0.0, %v527
      %v529 = vpop.f32.mrb[0].mxu0
      %v530 = vpop.f32.mrb[0].mxu0
      %v531 = vadd.f32 0.0, %v530
      %v532 = vpop.f32.mrb[0].mxu0
      %533 = vdwg.mxu0
      %v534 = vpack.c.bf16 %v523, %v520
      %v535 = vpack.c.bf16 %v531, %v528
      %v540 = vunpack.c.l.b16 %v439
      %v541 = vunpack.c.l.b16 %v440
      %v542 = vunpack.c.l.b16 %v441
      %v543 = vunpack.c.l.b16 %v442
      %v544 = vpack.c.b16 %v541, %v540
      %v545 = vpack.c.b16 %v543, %v542
      %vm546 = vcmask 261120
      %v548 = vsel %vm546, %v544, 0
      %v551 = vsel %vm546, %v545, 0
      %553 = vmatprep.subr.bf16.mxu0 0
      %554 = vmatpush1.bf16.msra.mxu0 %v534
      %555 = vmatprep.subr.bf16.mxu0 0
      %556 = vmatpush1.bf16.msra.mxu0 %v535
      %557 = vmatprep.subr.bf16.mxu0 0
      %558 = vmatpush1.bf16.msra.mxu0 0
      %559 = vmatprep.subr.bf16.mxu0 0
      %560 = vmatpush1.bf16.msra.mxu0 0
      %561 = vmatprep.subr.bf16.mxu0 0
      %562 = vmatpush1.bf16.msra.mxu0 0
      %563 = vmatprep.subr.bf16.mxu0 0
      %564 = vmatpush1.bf16.msra.mxu0 0
      %565 = vmatprep.subr.bf16.mxu0 0
      %566 = vmatpush1.bf16.msra.mxu0 0
      %567 = vmatprep.subr.bf16.mxu0 0
      %568 = vmatpush1.bf16.msra.mxu0 0
      %569 = vmatprep.subr.bf16.mxu0 0
      %570 = vmatpush1.bf16.msra.mxu0 0
      %571 = vmatprep.subr.bf16.mxu0 0
      %572 = vmatpush1.bf16.msra.mxu0 0
      %573 = vmatprep.subr.bf16.mxu0 0
      %574 = vmatpush1.bf16.msra.mxu0 0
      %575 = vmatprep.subr.bf16.mxu0 0
      %576 = vmatpush1.bf16.msra.mxu0 0
      %577 = vmatprep.subr.bf16.mxu0 0
      %578 = vmatpush1.bf16.msra.mxu0 0
      %579 = vmatprep.subr.bf16.mxu0 0
      %580 = vmatpush1.bf16.msra.mxu0 0
      %581 = vmatprep.subr.bf16.mxu0 0
      %582 = vmatpush1.bf16.msra.mxu0 0
      %583 = vmatprep.subr.bf16.mxu0 0
      %584 = vmatpush1.bf16.msra.mxu0 0
      %585 = vmatprep.mubr.bf16.mxu0 0
      %586 = vmatmul.mubr.bf16.gmra.mrb[0].mxu0 %v548
      %v587 = vpop.f32.mrb[0].mxu0
      %v588 = vadd.f32 0.0, %v587
      %v589 = vpop.f32.mrb[0].mxu0
      %v590 = vpop.f32.mrb[0].mxu0
      %v591 = vadd.f32 0.0, %v590
      %v592 = vpop.f32.mrb[0].mxu0
      %593 = vmatprep.mubr.bf16.mxu0 0
      %594 = vmatmul.mubr.bf16.gmra.mrb[0].mxu0 %v551
      %v595 = vpop.f32.mrb[0].mxu0
      %v596 = vadd.f32 0.0, %v595
      %v597 = vpop.f32.mrb[0].mxu0
      %v598 = vpop.f32.mrb[0].mxu0
      %v599 = vadd.f32 0.0, %v598
      %v600 = vpop.f32.mrb[0].mxu0
      %601 = vdwg.mxu0
      %v602 = vmul.f32 %v450, %v588
      %v603 = vmul.f32 %v455, %v591
      %v604 = vmul.f32 %v460, %v596
      %v605 = vmul.f32 %v465, %v599
      %v606 = vld [vmem:[%s4] sm:$0x1]
      %v608 = vlaneseq
      %v609 = vshrl.u32 %v608, 7
      %v610 = vsub.s32 0, %v609
      %v611 = vrot.slane %v606, %v610
      %v613 = vadd.f32 %v602, %v611
      %v614 = vadd.f32 %v603, %v611
      %v615 = vadd.f32 %v604, %v611
      %v616 = vadd.f32 %v605, %v611
      %v617 = vmax.f32 %v613, 0.0
      %v618 = vmax.f32 %v614, 0.0
      %v619 = vmax.f32 %v615, 0.0
      %v620 = vmax.f32 %v616, 0.0
      %v621 = vmul.f32 %v617, %v450
      %v622 = vmul.f32 %v618, %v455
      %v623 = vmul.f32 %v619, %v460
      %v624 = vmul.f32 %v620, %v465
      %v625 = vpack.c.bf16 %v622, %v621
      %v626 = vpack.c.bf16 %v624, %v623
      %v627 = vld [vmem:[%s5] sm:$0xf]
      %v628 = vld [vmem:[%s5 + $0x4] sm:$0xf]
      %v629 = vld [vmem:[%s5 + $0x8] sm:$0xf]
      %v630 = vld [vmem:[%s5 + $0xc] sm:$0xf]
      %v635 = vunpack.c.l.b16 %v627
      %v636 = vunpack.c.l.b16 %v628
      %v637 = vunpack.c.l.b16 %v629
      %v638 = vunpack.c.l.b16 %v630
      %v639 = vpack.c.b16 %v636, %v635
      %v640 = vpack.c.b16 %v638, %v637
      %v644 = vsel %vm546, %v625, 0
      %v647 = vsel %vm546, %v626, 0
      %649 = vmatprep.subr.bf16.mxu0 0
      %650 = vmatpush1.bf16.msra.mxu0 %v639
      %651 = vmatprep.subr.bf16.mxu0 0
      %652 = vmatpush1.bf16.msra.mxu0 %v640
      %653 = vmatprep.subr.bf16.mxu0 0
      %654 = vmatpush1.bf16.msra.mxu0 0
      %655 = vmatprep.subr.bf16.mxu0 0
      %656 = vmatpush1.bf16.msra.mxu0 0
      %657 = vmatprep.subr.bf16.mxu0 0
      %658 = vmatpush1.bf16.msra.mxu0 0
      %659 = vmatprep.subr.bf16.mxu0 0
      %660 = vmatpush1.bf16.msra.mxu0 0
      %661 = vmatprep.subr.bf16.mxu0 0
      %662 = vmatpush1.bf16.msra.mxu0 0
      %663 = vmatprep.subr.bf16.mxu0 0
      %664 = vmatpush1.bf16.msra.mxu0 0
      %665 = vmatprep.subr.bf16.mxu0 0
      %666 = vmatpush1.bf16.msra.mxu0 0
      %667 = vmatprep.subr.bf16.mxu0 0
      %668 = vmatpush1.bf16.msra.mxu0 0
      %669 = vmatprep.subr.bf16.mxu0 0
      %670 = vmatpush1.bf16.msra.mxu0 0
      %671 = vmatprep.subr.bf16.mxu0 0
      %672 = vmatpush1.bf16.msra.mxu0 0
      %673 = vmatprep.subr.bf16.mxu0 0
      %674 = vmatpush1.bf16.msra.mxu0 0
      %675 = vmatprep.subr.bf16.mxu0 0
      %676 = vmatpush1.bf16.msra.mxu0 0
      %677 = vmatprep.subr.bf16.mxu0 0
      %678 = vmatpush1.bf16.msra.mxu0 0
      %679 = vmatprep.subr.bf16.mxu0 0
      %680 = vmatpush1.bf16.msra.mxu0 0
      %681 = vmatprep.mubr.bf16.mxu0 0
      %682 = vmatmul.mubr.bf16.gmra.mrb[0].mxu0 %v644
      %v683 = vpop.f32.mrb[0].mxu0
      %v684 = vadd.f32 0.0, %v683
      %v685 = vpop.f32.mrb[0].mxu0
      %v686 = vpop.f32.mrb[0].mxu0
      %v687 = vadd.f32 0.0, %v686
      %v688 = vpop.f32.mrb[0].mxu0
      %689 = vmatprep.mubr.bf16.mxu0 0
      %690 = vmatmul.mubr.bf16.gmra.mrb[0].mxu0 %v647
      %v691 = vpop.f32.mrb[0].mxu0
      %v692 = vadd.f32 0.0, %v691
      %v693 = vpop.f32.mrb[0].mxu0
      %v694 = vpop.f32.mrb[0].mxu0
      %v695 = vadd.f32 0.0, %v694
      %v696 = vpop.f32.mrb[0].mxu0
      %697 = vdwg.mxu0
      %v698 = vpack.c.bf16 %v687, %v684
      %v699 = vpack.c.bf16 %v695, %v692
      %700 = vmatprep.subr.bf16.mxu0 0
      %701 = vmatpush1.bf16.msra.mxu0 %v698
      %702 = vmatprep.subr.bf16.mxu0 0
      %703 = vmatpush1.bf16.msra.mxu0 %v699
      %704 = vmatprep.subr.bf16.mxu0 0
      %705 = vmatpush1.bf16.msra.mxu0 0
      %706 = vmatprep.subr.bf16.mxu0 0
      %707 = vmatpush1.bf16.msra.mxu0 0
      %708 = vmatprep.subr.bf16.mxu0 0
      %709 = vmatpush1.bf16.msra.mxu0 0
      %710 = vmatprep.subr.bf16.mxu0 0
      %711 = vmatpush1.bf16.msra.mxu0 0
      %712 = vmatprep.subr.bf16.mxu0 0
      %713 = vmatpush1.bf16.msra.mxu0 0
      %714 = vmatprep.subr.bf16.mxu0 0
      %715 = vmatpush1.bf16.msra.mxu0 0
      %716 = vmatprep.subr.bf16.mxu0 0
      %717 = vmatpush1.bf16.msra.mxu0 0
      %718 = vmatprep.subr.bf16.mxu0 0
      %719 = vmatpush1.bf16.msra.mxu0 0
      %720 = vmatprep.subr.bf16.mxu0 0
      %721 = vmatpush1.bf16.msra.mxu0 0
      %722 = vmatprep.subr.bf16.mxu0 0
      %723 = vmatpush1.bf16.msra.mxu0 0
      %724 = vmatprep.subr.bf16.mxu0 0
      %725 = vmatpush1.bf16.msra.mxu0 0
      %726 = vmatprep.subr.bf16.mxu0 0
      %727 = vmatpush1.bf16.msra.mxu0 0
      %728 = vmatprep.subr.bf16.mxu0 0
      %729 = vmatpush1.bf16.msra.mxu0 0
      %730 = vmatprep.subr.bf16.mxu0 0
      %731 = vmatpush1.bf16.msra.mxu0 0
      %732 = vmatprep.mubr.bf16.mxu0 0
      %733 = vmatmul.mubr.bf16.gmra.mrb[0].mxu0 %v548
      %v734 = vpop.f32.mrb[0].mxu0
      %v735 = vadd.f32 0.0, %v734
      %v736 = vpop.f32.mrb[0].mxu0
      %v737 = vpop.f32.mrb[0].mxu0
      %v738 = vadd.f32 0.0, %v737
      %v739 = vpop.f32.mrb[0].mxu0
      %740 = vmatprep.mubr.bf16.mxu0 0
      %741 = vmatmul.mubr.bf16.gmra.mrb[0].mxu0 %v551
      %v742 = vpop.f32.mrb[0].mxu0
      %v743 = vadd.f32 0.0, %v742
      %v744 = vpop.f32.mrb[0].mxu0
      %v745 = vpop.f32.mrb[0].mxu0
      %v746 = vadd.f32 0.0, %v745
      %v747 = vpop.f32.mrb[0].mxu0
      %748 = vdwg.mxu0
      %v749 = vmul.f32 %v450, %v735
      %v750 = vmul.f32 %v455, %v738
      %v751 = vmul.f32 %v460, %v743
      %v752 = vmul.f32 %v465, %v746
      %v753 = vld [vmem:[%s6] sm:$0x1]
      %v755 = vlaneseq
      %v756 = vshrl.u32 %v755, 7
      %v757 = vsub.s32 0, %v756
      %v758 = vrot.slane %v753, %v757
      %v760 = vadd.f32 %v749, %v758
      %v761 = vadd.f32 %v750, %v758
      %v762 = vadd.f32 %v751, %v758
      %v763 = vadd.f32 %v752, %v758
      %v764 = vmax.f32 %v760, 0.0
      %v765 = vmax.f32 %v761, 0.0
      %v766 = vmax.f32 %v762, 0.0
      %v767 = vmax.f32 %v763, 0.0
      %v768 = vpack.c.bf16 %v765, %v764
      %v769 = vpack.c.bf16 %v767, %v766
      %v770 = vld [vmem:[%s7] sm:$0xf]
      %v771 = vld [vmem:[%s7 + $0x4] sm:$0xf]
      %v772 = vld [vmem:[%s7 + $0x8] sm:$0xf]
      %v773 = vld [vmem:[%s7 + $0xc] sm:$0xf]
      %v774 = vld [vmem:[%s8] sm:$0x1]
      %v776 = vlaneseq
      %v777 = vshrl.u32 %v776, 7
      %v778 = vsub.s32 0, %v777
      %v779 = vrot.slane %v774, %v778
      %v785 = vunpack.c.l.b16 %v770
      %v786 = vunpack.c.l.b16 %v771
      %v787 = vunpack.c.l.b16 %v772
      %v788 = vunpack.c.l.b16 %v773
      %v789 = vpack.c.b16 %v786, %v785
      %v790 = vpack.c.b16 %v788, %v787
      %v794 = vsel %vm546, %v768, 0
      %v797 = vsel %vm546, %v769, 0
      %799 = vmatprep.subr.bf16.mxu0 0
      %800 = vmatpush1.bf16.msra.mxu0 %v789
      %801 = vmatprep.subr.bf16.mxu0 0
      %802 = vmatpush1.bf16.msra.mxu0 %v790
      %803 = vmatprep.subr.bf16.mxu0 0
      %804 = vmatpush1.bf16.msra.mxu0 0
      %805 = vmatprep.subr.bf16.mxu0 0
      %806 = vmatpush1.bf16.msra.mxu0 0
      %807 = vmatprep.subr.bf16.mxu0 0
      %808 = vmatpush1.bf16.msra.mxu0 0
      %809 = vmatprep.subr.bf16.mxu0 0
      %810 = vmatpush1.bf16.msra.mxu0 0
      %811 = vmatprep.subr.bf16.mxu0 0
      %812 = vmatpush1.bf16.msra.mxu0 0
      %813 = vmatprep.subr.bf16.mxu0 0
      %814 = vmatpush1.bf16.msra.mxu0 0
      %815 = vmatprep.subr.bf16.mxu0 0
      %816 = vmatpush1.bf16.msra.mxu0 0
      %817 = vmatprep.subr.bf16.mxu0 0
      %818 = vmatpush1.bf16.msra.mxu0 0
      %819 = vmatprep.subr.bf16.mxu0 0
      %820 = vmatpush1.bf16.msra.mxu0 0
      %821 = vmatprep.subr.bf16.mxu0 0
      %822 = vmatpush1.bf16.msra.mxu0 0
      %823 = vmatprep.subr.bf16.mxu0 0
      %824 = vmatpush1.bf16.msra.mxu0 0
      %825 = vmatprep.subr.bf16.mxu0 0
      %826 = vmatpush1.bf16.msra.mxu0 0
      %827 = vmatprep.subr.bf16.mxu0 0
      %828 = vmatpush1.bf16.msra.mxu0 0
      %829 = vmatprep.subr.bf16.mxu0 0
      %830 = vmatpush1.bf16.msra.mxu0 0
      %831 = vmatprep.mubr.bf16.mxu0 0
      %832 = vmatmul.mubr.bf16.gmra.mrb[0].mxu0 %v794
      %v833 = vpop.f32.mrb[0].mxu0
      %v834 = vadd.f32 %v779, %v833
      %v835 = vpop.f32.mrb[0].mxu0
      %v836 = vpop.f32.mrb[0].mxu0
      %v837 = vadd.f32 %v779, %v836
      %v838 = vpop.f32.mrb[0].mxu0
      %839 = vmatprep.mubr.bf16.mxu0 0
      %840 = vmatmul.mubr.bf16.gmra.mrb[0].mxu0 %v797
      %v841 = vpop.f32.mrb[0].mxu0
      %v842 = vadd.f32 %v779, %v841
      %v843 = vpop.f32.mrb[0].mxu0
      %v844 = vpop.f32.mrb[0].mxu0
      %v845 = vadd.f32 %v779, %v844
      %v846 = vpop.f32.mrb[0].mxu0
      %847 = vdwg.mxu0
      %v848 = vmax.f32 %v834, 0.0
      %v849 = vmax.f32 %v837, 0.0
      %v850 = vmax.f32 %v842, 0.0
      %v851 = vmax.f32 %v845, 0.0
      %v852 = vpack.c.bf16 %v849, %v848
      %v853 = vpack.c.bf16 %v851, %v850
      %v854 = vld [vmem:[%s9] sm:$0xf]
      %v855 = vld [vmem:[%s9 + $0x4] sm:$0xf]
      %v856 = vld [vmem:[%s9 + $0x8] sm:$0xf]
      %v857 = vld [vmem:[%s9 + $0xc] sm:$0xf]
      %v858 = vld [vmem:[%s10] sm:$0x1]
      %v860 = vlaneseq
      %v861 = vshrl.u32 %v860, 7
      %v862 = vsub.s32 0, %v861
      %v863 = vrot.slane %v858, %v862
      %v869 = vunpack.c.l.b16 %v854
      %v870 = vunpack.c.l.b16 %v855
      %v871 = vunpack.c.l.b16 %v856
      %v872 = vunpack.c.l.b16 %v857
      %v873 = vpack.c.b16 %v870, %v869
      %v874 = vpack.c.b16 %v872, %v871
      %v878 = vsel %vm546, %v852, 0
      %v881 = vsel %vm546, %v853, 0
      %883 = vmatprep.subr.bf16.mxu0 0
      %884 = vmatpush1.bf16.msra.mxu0 %v873
      %885 = vmatprep.subr.bf16.mxu0 0
      %886 = vmatpush1.bf16.msra.mxu0 %v874
      %887 = vmatprep.subr.bf16.mxu0 0
      %888 = vmatpush1.bf16.msra.mxu0 0
      %889 = vmatprep.subr.bf16.mxu0 0
      %890 = vmatpush1.bf16.msra.mxu0 0
      %891 = vmatprep.subr.bf16.mxu0 0
      %892 = vmatpush1.bf16.msra.mxu0 0
      %893 = vmatprep.subr.bf16.mxu0 0
      %894 = vmatpush1.bf16.msra.mxu0 0
      %895 = vmatprep.subr.bf16.mxu0 0
      %896 = vmatpush1.bf16.msra.mxu0 0
      %897 = vmatprep.subr.bf16.mxu0 0
      %898 = vmatpush1.bf16.msra.mxu0 0
      %899 = vmatprep.subr.bf16.mxu0 0
      %900 = vmatpush1.bf16.msra.mxu0 0
      %901 = vmatprep.subr.bf16.mxu0 0
      %902 = vmatpush1.bf16.msra.mxu0 0
      %903 = vmatprep.subr.bf16.mxu0 0
      %904 = vmatpush1.bf16.msra.mxu0 0
      %905 = vmatprep.subr.bf16.mxu0 0
      %906 = vmatpush1.bf16.msra.mxu0 0
      %907 = vmatprep.subr.bf16.mxu0 0
      %908 = vmatpush1.bf16.msra.mxu0 0
      %909 = vmatprep.subr.bf16.mxu0 0
      %910 = vmatpush1.bf16.msra.mxu0 0
      %911 = vmatprep.subr.bf16.mxu0 0
      %912 = vmatpush1.bf16.msra.mxu0 0
      %913 = vmatprep.subr.bf16.mxu0 0
      %914 = vmatpush1.bf16.msra.mxu0 0
      %915 = vmatprep.mubr.bf16.mxu0 0
      %916 = vmatmul.mubr.bf16.gmra.mrb[0].mxu0 %v878
      %v917 = vpop.f32.mrb[0].mxu0
      %v918 = vadd.f32 %v863, %v917
      %v919 = vpop.f32.mrb[0].mxu0
      %v920 = vpop.f32.mrb[0].mxu0
      %v921 = vadd.f32 %v863, %v920
      %v922 = vpop.f32.mrb[0].mxu0
      %923 = vmatprep.mubr.bf16.mxu0 0
      %924 = vmatmul.mubr.bf16.gmra.mrb[0].mxu0 %v881
      %v925 = vpop.f32.mrb[0].mxu0
      %v926 = vadd.f32 %v863, %v925
      %v927 = vpop.f32.mrb[0].mxu0
      %v928 = vpop.f32.mrb[0].mxu0
      %v929 = vadd.f32 %v863, %v928
      %v930 = vpop.f32.mrb[0].mxu0
      %931 = vdwg.mxu0
      %932 = vst.msk [vmem:[%s432] sm:$0xff] %vm474, %v918
      %933 = vst.msk [vmem:[%s432 + $0x8] sm:$0xff] %vm474, %v921
      %934 = vst.msk [vmem:[%s432 + $0x10] sm:$0xff] %vm474, %v926
      %935 = vst.msk [vmem:[%s432 + $0x18] sm:$0xff] %vm474, %v929
      %s936 = smul.u32 4, %s22
      %p937 = scmp.lt.s32.totalorder %s936, 15
      %s938 = scalar_select %p937, %s936, 15
      %s939 = smul.addr %s938, 8
      %s940 = scalar_lea.vmem %s11, %s939
      // Predicated region
      $region65: #{tpu_custom_call.1} parent=63 // pred_check
        %p941 = pneg %p286
      $region66: #{tpu_custom_call.1} parent=63 // pred_check_branch
        %943 = sbr.rel (%p941) target = $region68
      $region67: #{tpu_custom_call.1} parent=63 // pred_region
        %s944 = smul.u32 4, %s22
      $region68: #{tpu_custom_call.1} parent=63 // pred_fallthru
        _
    $region64: #{tpu_custom_call.1} parent=5 // pred_fallthru
      _
    %p945 = scmp.le.s32.totalorder 2, %s17
    // Predicated region
    $region69: #{tpu_custom_call.1} parent=5 // pred_check
      %p946 = pneg %p945
    $region70: #{tpu_custom_call.1} parent=5 // pred_check_branch
      %948 = sbr.rel (%p946) target = $region72
    $region71: #{tpu_custom_call.1} parent=5 // pred_region
      %s949 = ssub.s32 %s17, 2
      // Predicated region
      $region73: #{tpu_custom_call.1} parent=71 // pred_check
        %p950 = pneg %p292
      $region74: #{tpu_custom_call.1} parent=71 // pred_check_branch
        %952 = sbr.rel (%p950) target = $region76
      $region75: #{tpu_custom_call.1} parent=71 // pred_region
        %s953 = smul.u32 4, %s23
        %p954 = scmp.lt.s32.totalorder %s953, 15
        %s955 = scalar_select %p954, %s953, 15
        %s956 = smul.addr %s955, 8
        %s957 = scalar_lea.vmem %s11, %s956
      $region76: #{tpu_custom_call.1} parent=71 // pred_fallthru
        _
    $region72: #{tpu_custom_call.1} parent=5 // pred_fallthru
      _
  $region6: #{tpu_custom_call.1} parent=0 // loop_footer
    %s21 = sadd.s32 1, %s17
  $region7: #{tpu_custom_call.1} parent=0 // loop_footer_branch
    %16 = sbr.rel target = $region3
  $region8: #{tpu_custom_call.1} parent=0 // loop_exit
    _

</llo_original>
